<compile_context>
chip_gen: v6e
topology: v6e:2x2x1
jax: 0.10.0
libtpu: 0.0.40
codegen_flags: <defaults>
</compile_context>

<pallas_src>
import functools
import math

import jax
import jax.numpy as jnp
from jax import lax
from jax.experimental import pallas as pl
from jax.experimental.pallas import tpu as pltpu

_MIB = 1024 * 1024


def _tpu_budget():
    """Returns (target_block_bytes_per_input, vmem_limit_bytes, split_hint)."""
    try:
        vmem_cap = int(pltpu.get_tpu_info().vmem_capacity_bytes)
    except Exception:  # query unavailable -> conservative defaults
        vmem_cap = 64 * _MIB
    if vmem_cap <= 96 * _MIB:
        # v7x-like: 64 MiB VMEM per TensorCore, 2 TCs/chip, fastest HBM.
        return 4 * _MIB, min(48 * _MIB, (vmem_cap * 3) // 4), 2
    # v5e / v6e: single TensorCore, 128 MiB physical VMEM.
    return 8 * _MIB, min(80 * _MIB, (vmem_cap * 3) // 4), 1


def _mix_loss_kernel(x_ref, y_ref, o_ref, acc_ref, *, w_l1, w_mse, inv_n,
                     rows, half_tiles, need_mask):
    c = pl.program_id(0)   # TensorCore-split ("parallel") axis
    i = pl.program_id(1)   # streaming / reduction axis

    @pl.when(i == 0)
    def _init():
        acc_ref[...] = jnp.zeros_like(acc_ref)

    block_rows, lane_w = x_ref.shape
    acc_rows = acc_ref.shape[0]

    d = x_ref[...].astype(jnp.float32) - y_ref[...].astype(jnp.float32)
    a = jnp.abs(d)
    # w_l1*|d| + w_mse*d^2  ==  |d| * (w_l1 + w_mse*|d|)   (5 VALU ops/vreg)
    contrib = a * (jnp.float32(w_l1) + jnp.float32(w_mse) * a)

    def _accumulate(v):
        if block_rows != acc_rows:
            # Fold sublane groups with vreg-wise adds into the small acc
            # (removes a full-block acc load + store per step, frees VMEM).
            v = v.reshape(block_rows // acc_rows, acc_rows, lane_w).sum(axis=0)
        acc_ref[...] += v

    if need_mask:   # static python bool -> zero cost when coverage is exact
        base_row = (c * half_tiles + i) * block_rows

        @pl.when(base_row + block_rows <= rows)
        def _interior():                      # hot path: no mask ops
            _accumulate(contrib)

        @pl.when(base_row + block_rows > rows)
        def _boundary():
            # NOTE: keep this a *select* (jnp.where), not a multiply: the OOB
            # rows of the (clamped) last tile hold unspecified data and a
            # multiply would propagate NaN/Inf garbage.
            row_ids = lax.broadcasted_iota(jnp.int32, (block_rows, 1), 0)
            _accumulate(jnp.where(base_row + row_ids < rows, contrib, 0.0))
    else:
        _accumulate(contrib)

    @pl.when(i == pl.num_programs(1) - 1)
    def _finalize():
        partial = jnp.sum(acc_ref[...]) * jnp.float32(inv_n)
        o_ref[...] = jnp.full(o_ref.shape, partial, jnp.float32)


def mix_loss(x, y, *, w_l1=0.5, w_mse=0.5):
    """0.5 * L1Loss(x, y) + 0.5 * MSELoss(x, y), both with 'mean' reduction."""
    assert x.shape == y.shape and x.dtype == y.dtype
    n_elems = int(math.prod(x.shape))
    w_l1 = float(w_l1)
    w_mse = float(w_mse)
    inv_n = 1.0 / float(n_elems)

    xf = x.reshape(-1)
    yf = y.reshape(-1)

    # <128-element tail: compute in plain JAX instead of jnp.pad-ing both
    # full inputs (an extra read+write HBM pass each).
    tail = n_elems % 128
    main = n_elems - tail
    tail_sum = None
    if tail:
        # TODO(synk): the prefix slice below may still materialize a copy of
        # the aligned prefix; a fully copy-free tail would need manual DMA.
        dt = xf[main:].astype(jnp.float32) - yf[main:].astype(jnp.float32)
        at = jnp.abs(dt)
        tail_sum = jnp.sum(at * (w_l1 + w_mse * at))
    if main == 0:
        return tail_sum * jnp.float32(inv_n)

    # Widest lane-dense last dim that divides the aligned element count.
    lane_w = 128
    for cand in (1024, 512, 256):
        if main % cand == 0:
            lane_w = cand
            break
    rows = main // lane_w
    x_main = xf if tail == 0 else xf[:main]
    y_main = yf if tail == 0 else yf[:main]
    x2 = x_main.reshape(rows, lane_w)
    y2 = y_main.reshape(rows, lane_w)

    target_block_bytes, vmem_limit, split_hint = _tpu_budget()

    itemsize = jnp.dtype(x.dtype).itemsize
    # Big streaming block, row count a multiple of 8 (sublane aligned).
    block_rows = max(8, (target_block_bytes // (lane_w * itemsize)) // 8 * 8)
    if rows <= block_rows:
        block_rows = rows          # single block == full dim (always legal)
    n_tiles = -(-rows // block_rows)

    # Split the streaming range only where there are 2 TensorCores (v7x);
    # on single-TC v5e/v6e the split would just be a serial loop plus a
    # wasted clamped block re-read.
    split = split_hint if n_tiles >= 2 else 1
    half_tiles = -(-n_tiles // split)
    need_mask = (split * half_tiles * block_rows) != rows

    if split * half_tiles > n_tiles:
        # Over-coverage steps re-read the last real block; their contribution
        # is masked to zero in the kernel (base_row >= rows).
        def in_map(c, i):
            return (jnp.minimum(c * half_tiles + i, n_tiles - 1), 0)
    else:
        def in_map(c, i):
            return (c * half_tiles + i, 0)

    # Small accumulator: fold sublane groups when block_rows is 8-aligned.
    acc_rows = 8 if block_rows % 8 == 0 else block_rows

    kernel = functools.partial(
        _mix_loss_kernel,
        w_l1=w_l1, w_mse=w_mse, inv_n=inv_n,
        rows=rows, half_tiles=half_tiles, need_mask=need_mask)

    out = pl.pallas_call(
        kernel,
        out_shape=jax.ShapeDtypeStruct((split, 8, 128), jnp.float32),
        grid_spec=pltpu.PrefetchScalarGridSpec(
            num_scalar_prefetch=0,
            grid=(split, half_tiles),
            in_specs=[
                pl.BlockSpec((block_rows, lane_w), in_map),
                pl.BlockSpec((block_rows, lane_w), in_map),
            ],
            out_specs=pl.BlockSpec((1, 8, 128), lambda c, i: (c, 0, 0)),
            scratch_shapes=[pltpu.VMEM((acc_rows, lane_w), jnp.float32)],
        ),
        compiler_params=pltpu.CompilerParams(
            # TODO(synk): verify in xprof that this axis shards across both
            # v7x TensorCores; if not, switch it to pltpu.CORE_PARALLEL.
            dimension_semantics=("parallel", "arbitrary"),
            vmem_limit_bytes=int(vmem_limit),
        ),
        cost_estimate=pl.CostEstimate(
            flops=5 * main,
            transcendentals=0,
            bytes_accessed=2 * main * itemsize + split * 8 * 128 * 4),
    )(x2, y2)

    # Each split wrote its partial (already scaled by 1/N) broadcast over its
    # (8,128) output block; pick one element per split and add.
    result = jnp.sum(out[:, 0, 0])
    if tail_sum is not None:
        result = result + tail_sum * jnp.float32(inv_n)
    return result


if __name__ == "__main__":
    key = jax.random.PRNGKey(0)
    kx, ky = jax.random.split(key)
    # small NCHW shapes consistent with a typical conv-net loss input
    x = jax.random.normal(kx, (2, 4, 16, 16), dtype=jnp.float32)
    y = jax.random.normal(ky, (2, 4, 16, 16), dtype=jnp.float32)

    loss = mix_loss(x, y)
    jax.block_until_ready(loss)

    # pure-JAX reference for sanity
    d = x - y
    ref = 0.5 * jnp.mean(jnp.abs(d)) + 0.5 * jnp.mean(d * d)
    assert jnp.allclose(loss, ref, rtol=1e-5, atol=1e-6), (loss, ref)

    print("KERNEL_OK")
</pallas_src>

<mosaic_0001>
module attributes {stable_mosaic.version = 11 : i64} {
  func.func @_mix_loss_kernel(%arg0: i32, %arg1: i32, %arg2: memref<2x1024xf32, #tpu.memory_space<vmem>>, %arg3: memref<2x1024xf32, #tpu.memory_space<vmem>>, %arg4: memref<1x8x128xf32, #tpu.memory_space<vmem>>, %arg5: memref<2x1024xf32, #tpu.memory_space<vmem>>) attributes {dimension_semantics = [#tpu.dimension_semantics<parallel>, #tpu.dimension_semantics<arbitrary>], iteration_bounds = array<i64: 1, 1>, scalar_prefetch = 0 : i64, scratch_operands = 1 : i64, tpu.core_type = #tpu.core_type<tc>, window_params = [{transform_indices = @transform_0, window_bounds = array<i64: 2, 1024>}, {transform_indices = @transform_1, window_bounds = array<i64: 2, 1024>}, {transform_indices = @transform_2, window_bounds = array<i64: 1, 8, 128>}]} {
    %c0_i32 = arith.constant 0 : i32
    %0 = arith.cmpi eq, %arg1, %c0_i32 : i32
    %1 = arith.extui %0 : i1 to i32
    %c0_i32_0 = arith.constant 0 : i32
    %2 = arith.cmpi ne, %1, %c0_i32_0 : i32
    scf.if %2 {
      %cst_11 = arith.constant 0.000000e+00 : f32
      %18 = vector.broadcast %cst_11 : f32 to vector<2x1024xf32>
      %c0_12 = arith.constant 0 : index
      %c0_13 = arith.constant 0 : index
      %19 = vector.load %arg5[%c0_12, %c0_13] : memref<2x1024xf32, #tpu.memory_space<vmem>>, vector<2x1024xf32>
      tpu.vector_store %arg5[%c0_12, %c0_13], %18 {strides = array<i32>} : memref<2x1024xf32, #tpu.memory_space<vmem>>, vector<2x1024xf32>,
    } else {
    }
    %c0 = arith.constant 0 : index
    %c0_1 = arith.constant 0 : index
    %3 = vector.load %arg2[%c0, %c0_1] : memref<2x1024xf32, #tpu.memory_space<vmem>>, vector<2x1024xf32>
    %c0_2 = arith.constant 0 : index
    %c0_3 = arith.constant 0 : index
    %4 = vector.load %arg3[%c0_2, %c0_3] : memref<2x1024xf32, #tpu.memory_space<vmem>>, vector<2x1024xf32>
    %5 = arith.subf %3, %4 : vector<2x1024xf32>
    %6 = math.absf %5 : vector<2x1024xf32>
    %cst = arith.constant 5.000000e-01 : f32
    %7 = vector.broadcast %cst : f32 to vector<2x1024xf32>
    %8 = arith.mulf %7, %6 : vector<2x1024xf32>
    %cst_4 = arith.constant 5.000000e-01 : f32
    %9 = vector.broadcast %cst_4 : f32 to vector<2x1024xf32>
    %10 = arith.addf %9, %8 : vector<2x1024xf32>
    %11 = arith.mulf %6, %10 : vector<2x1024xf32>
    %c0_5 = arith.constant 0 : index
    %c0_6 = arith.constant 0 : index
    %12 = vector.load %arg5[%c0_5, %c0_6] : memref<2x1024xf32, #tpu.memory_space<vmem>>, vector<2x1024xf32>
    %13 = arith.addf %12, %11 : vector<2x1024xf32>
    %c0_7 = arith.constant 0 : index
    %c0_8 = arith.constant 0 : index
    %14 = vector.load %arg5[%c0_7, %c0_8] : memref<2x1024xf32, #tpu.memory_space<vmem>>, vector<2x1024xf32>
    tpu.vector_store %arg5[%c0_7, %c0_8], %13 {strides = array<i32>} : memref<2x1024xf32, #tpu.memory_space<vmem>>, vector<2x1024xf32>,
    %c0_i32_9 = arith.constant 0 : i32
    %15 = arith.cmpi eq, %arg1, %c0_i32_9 : i32
    %16 = arith.extui %15 : i1 to i32
    %c0_i32_10 = arith.constant 0 : i32
    %17 = arith.cmpi ne, %16, %c0_i32_10 : i32
    scf.if %17 {
      %c0_11 = arith.constant 0 : index
      %c0_12 = arith.constant 0 : index
      %18 = vector.load %arg5[%c0_11, %c0_12] : memref<2x1024xf32, #tpu.memory_space<vmem>>, vector<2x1024xf32>
      %19 = vector.shape_cast %18 : vector<2x1024xf32> to vector<1x2x1024xf32>
      %cst_13 = arith.constant dense<0.000000e+00> : vector<1xf32>
      %20 = vector.multi_reduction <add>, %19, %cst_13 [1, 2] : vector<1x2x1024xf32> to vector<1xf32>
      %21 = vector.shape_cast %20 : vector<1xf32> to vector<1x1x1xf32>
      %22 = vector.extract %21[0, 0, 0] : f32 from vector<1x1x1xf32>
      %cst_14 = arith.constant 4.8828125E-4 : f32
      %23 = arith.mulf %22, %cst_14 : f32
      %24 = vector.broadcast %23 : f32 to vector<1x8x128xf32>
      %c0_15 = arith.constant 0 : index
      %c0_16 = arith.constant 0 : index
      %c0_17 = arith.constant 0 : index
      %25 = vector.load %arg4[%c0_15, %c0_16, %c0_17] : memref<1x8x128xf32, #tpu.memory_space<vmem>>, vector<1x8x128xf32>
      tpu.vector_store %arg4[%c0_15, %c0_16, %c0_17], %24 {strides = array<i32>} : memref<1x8x128xf32, #tpu.memory_space<vmem>>, vector<1x8x128xf32>,
    } else {
    }
    return
  }
  func.func @transform_0(%arg0: i32, %arg1: i32) -> (i32, i32) {
    %c1_i32 = arith.constant 1 : i32
    %0 = arith.muli %arg0, %c1_i32 : i32
    %1 = arith.addi %0, %arg1 : i32
    %c0_i32 = arith.constant 0 : i32
    %c0_i32_0 = arith.constant 0 : i32
    return %1, %c0_i32 : i32, i32
  }
  func.func @transform_1(%arg0: i32, %arg1: i32) -> (i32, i32) {
    %c1_i32 = arith.constant 1 : i32
    %0 = arith.muli %arg0, %c1_i32 : i32
    %1 = arith.addi %0, %arg1 : i32
    %c0_i32 = arith.constant 0 : i32
    %c0_i32_0 = arith.constant 0 : i32
    return %1, %c0_i32 : i32, i32
  }
  func.func @transform_2(%arg0: i32, %arg1: i32) -> (i32, i32, i32) {
    %c0_i32 = arith.constant 0 : i32
    %c0_i32_0 = arith.constant 0 : i32
    %c0_i32_1 = arith.constant 0 : i32
    return %arg0, %c0_i32, %c0_i32_0 : i32, i32, i32
  }
}

</mosaic_0001>

<llo_original>
// kernel: tpu_custom_call.1
$region0: #{tpu_custom_call.1}
  #allocation0 [shape = 'u32[]', space=smem, size = 0x4, offset = 0x4, fixed_abs, tag = 'smem constant byte address 0x4 - core index']
  #allocation1 [shape = 'u32[144,128]{1,0:T(1,128)}', space=vmem, size = 0x12000, scoped, tag = 'internal scratch']
  #allocation2 [shape = 'f32[2,1024]{1,0:T(2,128)}', space=vmem, size = 0x2000, scoped, tag = 'scratch operand']
  %s0 = inlined_call_operand.hbm [shape: f32[2,1024], index: 0, kind: input, shape index: {}]
  %s1 = inlined_call_operand.hbm [shape: f32[2,1024], index: 1, kind: input, shape index: {}]
  %s2 = inlined_call_operand.hbm [shape: f32[1,8,128], index: 2, kind: output, shape index: {}]
  %s3 = sld [smem:[#allocation0]]
  $region34: #{tpu_custom_call.1} parent=0
    _
  %s5 = ssub.s32 1, %s3
  %s6 = scalar_select 0, %s5, %s3
  $region1: #{tpu_custom_call.1} parent=0
    #allocation3 [shape = 'u8[8192]{0}', space=vmem, size = 0x2000, scoped, tag = 'input window, operand 0, single buffered']
    #allocation4 [shape = 's32[1]{0}', space=sflag, size = 0x4, scoped, tag = 'scoped memory for tpu_custom_call.1']
    #allocation5 [shape = 's32[1]{0}', space=sflag, size = 0x4, scoped, tag = 'scoped memory for tpu_custom_call.1']
    #allocation6 [shape = 'u8[8192]{0}', space=vmem, size = 0x2000, scoped, tag = 'input window, operand 1, single buffered']
    #allocation7 [shape = 's32[1]{0}', space=sflag, size = 0x4, scoped, tag = 'scoped memory for tpu_custom_call.1']
    #allocation8 [shape = 'u8[4096]{0}', space=vmem, size = 0x1000, scoped, tag = 'output window, operand 0, single buffered']
    %7 = vsyncpa [#allocation4], 0
    %8 = vsyncpa [#allocation7], 0
    %9 = vsyncpa [#allocation5], 0
    // Predicated region
    $region2: #{tpu_custom_call.1} parent=1 // pred_check
      _
    $region3: #{tpu_custom_call.1} parent=1 // pred_check_branch
      %11 = sbr.rel (0) target = $region5
    $region4: #{tpu_custom_call.1} parent=1 // pred_region
      %s12 = sadd.s32 0, 0
      %s14 = ssub.s32 256, 256
      %15 = vsyncadd [#allocation4], %s14
      %s16 = smul.addr %s12, 8
      %s17 = smul.addr %s16, 32
      %s18 = scalar_lea.hbm %s0, %s17
      %s20 = sshll.u32 [#allocation3], 4
      %s21 = int_to_ptr.vmem [resolvable:$true] %s20
      %23 = dma.hbm_to_vmem [thread:$0]  %s18, 256, %s21, [#allocation4]
    $region5: #{tpu_custom_call.1} parent=1 // pred_fallthru
      _
    // Predicated region
    $region6: #{tpu_custom_call.1} parent=1 // pred_check
      _
    $region7: #{tpu_custom_call.1} parent=1 // pred_check_branch
      %25 = sbr.rel (0) target = $region9
    $region8: #{tpu_custom_call.1} parent=1 // pred_region
      %s26 = sadd.s32 0, 0
      %s28 = ssub.s32 256, 256
      %29 = vsyncadd [#allocation7], %s28
      %s30 = smul.addr %s26, 8
      %s31 = smul.addr %s30, 32
      %s32 = scalar_lea.hbm %s1, %s31
      %s34 = sshll.u32 [#allocation6], 4
      %s35 = int_to_ptr.vmem [resolvable:$true] %s34
      %37 = dma.hbm_to_vmem [thread:$0]  %s32, 256, %s35, [#allocation7]
    $region9: #{tpu_custom_call.1} parent=1 // pred_fallthru
      _
    // Predicated region
    $region10: #{tpu_custom_call.1} parent=1 // pred_check
      _
    $region11: #{tpu_custom_call.1} parent=1 // pred_check_branch
      %39 = sbr.rel (0) target = $region13
    $region12: #{tpu_custom_call.1} parent=1 // pred_region
      %40 = dma.done [#allocation4], 256
    $region13: #{tpu_custom_call.1} parent=1 // pred_fallthru
      _
    // Predicated region
    $region14: #{tpu_custom_call.1} parent=1 // pred_check
      _
    $region15: #{tpu_custom_call.1} parent=1 // pred_check_branch
      %42 = sbr.rel (0) target = $region17
    $region16: #{tpu_custom_call.1} parent=1 // pred_region
      %43 = dma.done [#allocation7], 256
    $region17: #{tpu_custom_call.1} parent=1 // pred_fallthru
      _
    %s44 = sadd.s32 0, 0
    %s45 = sadd.s32 0, 0
    %p46 = scmp.eq.s32.totalorder 0, 0
    // Predicated region
    $region18: #{tpu_custom_call.1} parent=1 // pred_check
      %p47 = pneg %p46
    $region19: #{tpu_custom_call.1} parent=1 // pred_check_branch
      %49 = sbr.rel (%p47) target = $region21
    $region20: #{tpu_custom_call.1} parent=1 // pred_region
      %50 = vst [vmem:[#allocation2] sm:$0xff] 0.0
      %51 = vst [vmem:[#allocation2 + $0x8] sm:$0xff] 0.0
    $region21: #{tpu_custom_call.1} parent=1 // pred_fallthru
      _
    %v52 = vld [vmem:[#allocation3] sm:$0xff]
    %v53 = vld [vmem:[#allocation3 + $0x8] sm:$0xff]
    %v54 = vld [vmem:[#allocation6] sm:$0xff]
    %v55 = vld [vmem:[#allocation6 + $0x8] sm:$0xff]
    %v56 = vsub.f32 %v52, %v54
    %v57 = vsub.f32 %v53, %v55
    %v58 = vand.u32 2147483647, %v56
    %v59 = vand.u32 2147483647, %v57
    %v60 = vmul.f32 %v58, 0.5
    %v61 = vmul.f32 %v59, 0.5
    %v62 = vadd.f32 %v60, 0.5
    %v63 = vadd.f32 %v61, 0.5
    %v64 = vmul.f32 %v58, %v62
    %v65 = vmul.f32 %v59, %v63
    %v66 = vld [vmem:[#allocation2] sm:$0xff]
    %v67 = vld [vmem:[#allocation2 + $0x8] sm:$0xff]
    %v68 = vadd.f32 %v66, %v64
    %v69 = vadd.f32 %v67, %v65
    %70 = vst [vmem:[#allocation2] sm:$0xff] %v68
    %71 = vst [vmem:[#allocation2 + $0x8] sm:$0xff] %v69
    // Predicated region
    $region22: #{tpu_custom_call.1} parent=1 // pred_check
      %p72 = pneg %p46
    $region23: #{tpu_custom_call.1} parent=1 // pred_check_branch
      %74 = sbr.rel (%p72) target = $region25
    $region24: #{tpu_custom_call.1} parent=1 // pred_region
      %v75 = vld [vmem:[#allocation2] sm:$0xff]
      %v76 = vld [vmem:[#allocation2 + $0x8] sm:$0xff]
      %v79 = vcombine.high %v75, %v75
      %v81 = vunpack.c.l.s4 1983009808
      %v82 = vunpack.c.0.s8 %v81
      %v83 = vlaneseq
      %v84 = vshrl.u32 %v83, 7
      %v85 = vsub.s32 %v82, %v84
      %v86 = vrot.slane %v75, %v85
      %v88 = vunpack.c.l.s4 1983009808
      %v89 = vunpack.c.0.s8 %v88
      %v90 = vlaneseq
      %v91 = vshrl.u32 %v90, 7
      %v92 = vsub.s32 %v89, %v91
      %v93 = vrot.slane %v79, %v92
      %v94 = vcombine.high %v86, %v86
      %v95 = vcombine.high %v93, %v93
      %v96 = vcombine.high %v76, %v76
      %v98 = vunpack.c.l.s4 1983009808
      %v99 = vunpack.c.0.s8 %v98
      %v100 = vlaneseq
      %v101 = vshrl.u32 %v100, 7
      %v102 = vsub.s32 %v99, %v101
      %v103 = vrot.slane %v76, %v102
      %v105 = vunpack.c.l.s4 1983009808
      %v106 = vunpack.c.0.s8 %v105
      %v107 = vlaneseq
      %v108 = vshrl.u32 %v107, 7
      %v109 = vsub.s32 %v106, %v108
      %v110 = vrot.slane %v96, %v109
      %v111 = vcombine.high %v103, %v103
      %v112 = vcombine.high %v110, %v110
      %vm121 = vcmask 1041408
      %v122 = vsel %vm121, %v86, 0.0
      %v123 = vsel %vm121, %v94, 0.0
      %v124 = vadd.f32 %v122, %v123
      %v125 = vsel %vm121, %v93, 0.0
      %v126 = vadd.f32 %v124, %v125
      %v127 = vsel %vm121, %v95, 0.0
      %v128 = vadd.f32 %v126, %v127
      %v129 = vsel %vm121, %v103, 0.0
      %v130 = vadd.f32 %v128, %v129
      %v131 = vsel %vm121, %v111, 0.0
      %v132 = vadd.f32 %v130, %v131
      %v133 = vsel %vm121, %v110, 0.0
      %v134 = vadd.f32 %v132, %v133
      %v135 = vsel %vm121, %v112, 0.0
      %v136 = vadd.f32 %v134, %v135
      %137 = vadd.xlane.f32.xlu0 %v136
      %v138 = vpop.xlane.xlu0 %137
      %v139 = vrot.slane %v138, 4
      %v140 = vadd.f32 %v138, %v139
      %v141 = vrot.slane %v140, 2
      %v142 = vadd.f32 %v140, %v141
      %v143 = vrot.slane %v142, 1
      %v144 = vadd.f32 %v142, %v143
      %s145 = vtos %v144
      %s146 = smul.f32 %s145, 0.00048828125
      %v147 = vstv %s146
      %148 = vst [vmem:[#allocation8] sm:$0xff] %v147
    $region25: #{tpu_custom_call.1} parent=1 // pred_fallthru
      _
    // Predicated region
    $region26: #{tpu_custom_call.1} parent=1 // pred_check
      _
    $region27: #{tpu_custom_call.1} parent=1 // pred_check_branch
      %150 = sbr.rel (0) target = $region29
    $region28: #{tpu_custom_call.1} parent=1 // pred_region
      %s152 = ssub.s32 128, 128
      %153 = vsyncadd [#allocation5], %s152
      %s155 = sshll.u32 [#allocation8], 4
      %s156 = int_to_ptr.vmem [resolvable:$true] %s155
      %158 = dma.vmem_to_hbm [thread:$0]  %s156, 128, %s2, [#allocation5]
    $region29: #{tpu_custom_call.1} parent=1 // pred_fallthru
      _
    // Predicated region
    $region30: #{tpu_custom_call.1} parent=1 // pred_check
      _
    $region31: #{tpu_custom_call.1} parent=1 // pred_check_branch
      %160 = sbr.rel (0) target = $region33
    $region32: #{tpu_custom_call.1} parent=1 // pred_region
      %161 = dma.done [#allocation5], 128
    $region33: #{tpu_custom_call.1} parent=1 // pred_fallthru
      _
    %162 = vsyncpa [#allocation4], 1
    %163 = vsyncpa [#allocation7], 1
    %164 = vsyncpa [#allocation5], 1

</llo_original>
